<compile_context>
chip_gen: v7x
topology: tpu7x:2x2x1
jax: 0.10.0
libtpu: 0.0.40
codegen_flags: <defaults>
</compile_context>

<pallas_src>
import functools
import math

import jax
import jax.numpy as jnp
from jax import lax
from jax.experimental import pallas as pl
from jax.experimental.pallas import tpu as pltpu


def _swish_f32(h):
    # x * sigmoid(x). exp() runs on the EUP; approx reciprocal keeps the divide
    # off the VALU (its own EUP slot), leaving vector-ALU slots free as TB grows.
    return h * pl.reciprocal(1.0 + jnp.exp(-h), approx=True)


def _mlp_encoder_z_kernel(*refs, num_hidden_extra, z_dim, compute_dtype):
    # ref layout:
    #   xs, ys, w1x, w1y, b1, (w_l, b_l) * num_hidden_extra, w_heads, b_heads (in)
    #   z_out = [z_mean | exp(z_log_std)]  -- single lane-denser output        (out)
    it = iter(refs)
    xs_ref = next(it)
    ys_ref = next(it)
    w1x_ref = next(it)
    w1y_ref = next(it)
    b1_ref = next(it)
    hidden = [(next(it), next(it)) for _ in range(num_hidden_extra)]
    wh_ref = next(it)
    bh_ref = next(it)
    z_ref = next(it)

    cd = compute_dtype
    x = xs_ref[...].astype(cd)
    y = ys_ref[...].astype(cd)

    # cat([xs, ys], -1) @ W1 == xs @ W1x + ys @ W1y  (W1 split row-wise in wrapper).
    h = (
        jnp.dot(x, w1x_ref[...].astype(cd), preferred_element_type=jnp.float32)
        + jnp.dot(y, w1y_ref[...].astype(cd), preferred_element_type=jnp.float32)
        + b1_ref[...].astype(jnp.float32)
    )
    h = _swish_f32(h)

    # NOTE: a static Python loop is fine for 1-2 extra hidden layers; for deep
    # uniform stacks, stack the weights into (L, h, h) and use lax.fori_loop so
    # live ranges stay bounded.
    for w_ref, b_ref in hidden:
        h = (
            jnp.dot(h.astype(cd), w_ref[...].astype(cd),
                    preferred_element_type=jnp.float32)
            + b_ref[...].astype(jnp.float32)
        )
        h = _swish_f32(h)

    # Fused heads: one matmul for [z_mean | z_log_std]; exp() applied only to the
    # log-std half via an iota mask (avoids an in-register slice / concat).
    zz = (
        jnp.dot(h.astype(cd), wh_ref[...].astype(cd),
                preferred_element_type=jnp.float32)
        + bh_ref[...].astype(jnp.float32)
    )
    col = lax.broadcasted_iota(jnp.int32, zz.shape, dimension=1)
    z_ref[...] = jnp.where(col < z_dim, zz, jnp.exp(zz)).astype(z_ref.dtype)


def _vmem_cap_bytes():
    # Per-generation VMEM budget (~72% of physical: 128 MiB on v5e/v6e, 64 MiB
    # per TensorCore on v7x).  Fallback is the most conservative chip (v7x).
    try:
        physical = int(pltpu.get_tpu_info().vmem_capacity_bytes)
    except Exception:
        physical = 64 << 20
    return int(physical * 0.72)


def mlp_encoder_z(xs, ys, params, *, use_bf16=True):
    """Pallas equivalent of MlpEncoderZ.forward -> (z_mean, z_std)."""
    (w1x, w1y, b1), hidden_layers, (wm, bm), (ws, bs) = params
    B, x_dim = xs.shape
    y_dim = ys.shape[1]
    z_dim = wm.shape[1]
    out_width = 2 * z_dim

    # Fuse the two output heads into one matmul / one output slab.
    w_heads = jnp.concatenate([wm, ws], axis=1)   # (h_last, 2*z_dim)
    b_heads = jnp.concatenate([bm, bs], axis=1)   # (1, 2*z_dim)

    if use_bf16:
        # bf16 operands (f32 accumulation in-kernel): single-pass MXU matmuls
        # and a halved xs/ys HBM stream.  Biases stay f32.
        xs_in = xs.astype(jnp.bfloat16)
        ys_in = ys.astype(jnp.bfloat16)
        w1x_in = w1x.astype(jnp.bfloat16)
        w1y_in = w1y.astype(jnp.bfloat16)
        hidden_in = [(w.astype(jnp.bfloat16), b) for w, b in hidden_layers]
        wh_in = w_heads.astype(jnp.bfloat16)
        compute_dtype = jnp.bfloat16
    else:
        xs_in, ys_in, w1x_in, w1y_in = xs, ys, w1x, w1y
        hidden_in = list(hidden_layers)
        wh_in = w_heads
        compute_dtype = jnp.float32

    weight_arrays = [w1x_in, w1y_in, b1]
    for w, b in hidden_in:
        weight_arrays += [w, b]
    weight_arrays += [wh_in, b_heads]
    weight_bytes = sum(int(a.size) * a.dtype.itemsize for a in weight_arrays)
    max_h = max([w1x.shape[1]] + [w.shape[1] for w, _ in hidden_layers])
    in_isz = xs_in.dtype.itemsize

    def vmem_need(tb):
        streams = tb * (x_dim + y_dim) * in_isz + tb * out_width * 4
        inter = 4 * tb * max_h * 4            # live f32 intermediates (slack)
        # Constant-index weight blocks are still double-buffered by default.
        return 2 * streams + 2 * weight_bytes + inter + (1 << 20)

    cap = _vmem_cap_bytes()

    # Batch tile: biggest power-of-two divisor of B that (a) fits the VMEM cap
    # (double-buffered streams) and (b) preferably leaves >= 2 grid steps so the
    # "parallel" batch axis shards across both v7x TensorCores.
    candidates = (4096, 2048, 1024, 512, 256, 128, 64, 32, 16, 8)
    TB = None
    for cand in candidates:
        if B % cand == 0 and B // cand >= 2 and vmem_need(cand) <= cap:
            TB = cand
            break
    if TB is None:
        for cand in candidates:
            if B % cand == 0 and vmem_need(cand) <= cap:
                TB = cand
                break
    if TB is None:
        TB = B  # full-extent block (tiny batches like the demo's B=2)
    # Fail loudly rather than silently under-budget VMEM.
    assert vmem_need(TB) <= cap, (
        f"MlpEncoderZ block footprint {vmem_need(TB)}B exceeds VMEM cap {cap}B")

    grid = (B // TB,)
    batch_map = lambda i: (i, 0)
    const_map = lambda i: (0, 0)

    in_arrays = [xs_in, ys_in, w1x_in, w1y_in, b1]
    in_specs = [
        pl.BlockSpec((TB, x_dim), batch_map),
        pl.BlockSpec((TB, y_dim), batch_map),
        pl.BlockSpec(w1x_in.shape, const_map),
        pl.BlockSpec(w1y_in.shape, const_map),
        pl.BlockSpec(b1.shape, const_map),
    ]
    # NOTE: at production-scale h_dims (1-4K) on v7x (64 MiB VMEM), add
    # pipeline_mode=pl.Buffered(1) to these constant-index weight specs so
    # resident weights are not double-buffered.  Irrelevant at h=32.
    for w, b in hidden_in:
        in_arrays += [w, b]
        in_specs += [pl.BlockSpec(w.shape, const_map),
                     pl.BlockSpec(b.shape, const_map)]
    in_arrays += [wh_in, b_heads]
    in_specs += [pl.BlockSpec(wh_in.shape, const_map),
                 pl.BlockSpec(b_heads.shape, const_map)]

    out_shape = jax.ShapeDtypeStruct((B, out_width), jnp.float32)
    out_specs = pl.BlockSpec((TB, out_width), batch_map)

    # Cost estimate (helps XLA schedule around this call).
    h0 = w1x.shape[1]
    flops = 2 * B * (x_dim + y_dim) * h0
    for w, _ in hidden_layers:
        flops += 2 * B * w.shape[0] * w.shape[1]
    flops += 2 * B * wm.shape[0] * out_width
    hidden_widths = [h0] + [w.shape[1] for w, _ in hidden_layers]
    transcendentals = B * (2 * sum(hidden_widths) + out_width)  # exp+rcp per swish, final exp
    bytes_accessed = sum(int(a.size) * a.dtype.itemsize for a in in_arrays)
    bytes_accessed += B * out_width * 4
    cost = pl.CostEstimate(flops=int(flops),
                           transcendentals=int(transcendentals),
                           bytes_accessed=int(bytes_accessed))

    kernel = functools.partial(
        _mlp_encoder_z_kernel,
        num_hidden_extra=len(hidden_in),
        z_dim=z_dim,
        compute_dtype=compute_dtype,
    )

    z_packed = pl.pallas_call(
        kernel,
        out_shape=out_shape,
        grid_spec=pltpu.PrefetchScalarGridSpec(
            num_scalar_prefetch=0,
            grid=grid,
            in_specs=in_specs,
            out_specs=out_specs,
        ),
        compiler_params=pltpu.CompilerParams(
            dimension_semantics=("parallel",),  # batch tiles shard across TCs on v7x
            vmem_limit_bytes=int(cap),
        ),
        cost_estimate=cost,
    )(*in_arrays)

    z_mean = z_packed[:, :z_dim]
    z_std = z_packed[:, z_dim:]
    return z_mean, z_std


# ---------------------------------------------------------------------------
# Parameter construction mirroring the PyTorch module layout.
# ---------------------------------------------------------------------------
def _linear_init(key, fan_in, fan_out):
    kw, kb = jax.random.split(key)
    lim = 1.0 / math.sqrt(fan_in)
    w = jax.random.uniform(kw, (fan_in, fan_out), jnp.float32, -lim, lim)
    b = jax.random.uniform(kb, (1, fan_out), jnp.float32, -lim, lim)
    return w, b


def init_mlp_encoder_z_params(key, x_dim, y_dim, z_dim, h_dims):
    # Mirrors MlpEncoderZ.__init__:
    #   [Linear(x_dim + y_dim, h_dims[0]), Swish()]
    #   + [Linear(h_dims[l], h_dims[l+1]), Swish()  for l in 1..len(h_dims)-2]
    #   + MultiOut([Linear(h_dims[-1], z_dim), Linear(h_dims[-1], z_dim)])
    n_extra = max(len(h_dims) - 2, 0)
    keys = jax.random.split(key, 1 + n_extra + 2)

    w1, b1 = _linear_init(keys[0], x_dim + y_dim, h_dims[0])
    w1x, w1y = w1[:x_dim], w1[x_dim:]  # split so the kernel avoids the concat

    hidden_layers = []
    for idx, l in enumerate(range(1, len(h_dims) - 1)):
        w, b = _linear_init(keys[1 + idx], h_dims[l], h_dims[l + 1])
        hidden_layers.append((w, b))

    wm, bm = _linear_init(keys[1 + n_extra], h_dims[-1], z_dim)
    ws, bs = _linear_init(keys[2 + n_extra], h_dims[-1], z_dim)
    return (w1x, w1y, b1), hidden_layers, (wm, bm), (ws, bs)


def _reference_forward(xs, ys, params):
    """Pure-JAX reference mirroring the PyTorch forward exactly (f32)."""
    (w1x, w1y, b1), hidden_layers, (wm, bm), (ws, bs) = params
    w1 = jnp.concatenate([w1x, w1y], axis=0)
    h = jnp.concatenate([xs, ys], axis=-1) @ w1 + b1
    h = h * jax.nn.sigmoid(h)  # Swish
    for w, b in hidden_layers:
        h = h @ w + b
        h = h * jax.nn.sigmoid(h)
    z_mean = h @ wm + bm
    z_log_std = h @ ws + bs
    return z_mean, jnp.exp(z_log_std)


if __name__ == "__main__":
    key = jax.random.PRNGKey(0)
    k_param, k_x, k_y = jax.random.split(key, 3)

    # Small shapes consistent with the module (16x16 pixels, 10 labels, style=16).
    B = 2
    x_dim = 256        # NUM_PIXELS (16*16)
    y_dim = 10         # NUM_LABELS
    z_dim = 16         # NUM_STYLE
    h_dims = (32, 32, 32)  # NUM_HIDDEN

    params = init_mlp_encoder_z_params(k_param, x_dim, y_dim, z_dim, h_dims)

    xs = jax.random.uniform(k_x, (B, x_dim), dtype=jnp.float32)
    label_idx = jax.random.randint(k_y, (B,), 0, y_dim)
    ys = jax.nn.one_hot(label_idx, y_dim, dtype=jnp.float32)

    ref_mean, ref_std = _reference_forward(xs, ys, params)

    # f32-operand path: tight-ish check (approx-reciprocal sigmoid != bit exact).
    zm32, zs32 = mlp_encoder_z(xs, ys, params, use_bf16=False)
    zm32 = jax.block_until_ready(zm32)
    zs32 = jax.block_until_ready(zs32)
    assert zm32.shape == (B, z_dim) and zs32.shape == (B, z_dim)
    assert jnp.allclose(zm32, ref_mean, rtol=5e-3, atol=5e-3), (zm32, ref_mean)
    assert jnp.allclose(zs32, ref_std, rtol=5e-3, atol=5e-3), (zs32, ref_std)

    # bf16-operand path (default perf config): looser tolerance vs f32 reference.
    z_mean, z_std = mlp_encoder_z(xs, ys, params, use_bf16=True)
    z_mean = jax.block_until_ready(z_mean)
    z_std = jax.block_until_ready(z_std)
    assert z_mean.shape == (B, z_dim) and z_std.shape == (B, z_dim)
    assert jnp.allclose(z_mean, ref_mean, rtol=5e-2, atol=5e-2), (z_mean, ref_mean)
    assert jnp.allclose(z_std, ref_std, rtol=5e-2, atol=5e-2), (z_std, ref_std)

    print("KERNEL_OK")
</pallas_src>

<mosaic_0001>
module attributes {stable_mosaic.version = 11 : i64} {
  func.func @_mlp_encoder_z_kernel(%arg0: i32, %arg1: memref<2x256xf32, #tpu.memory_space<vmem>>, %arg2: memref<2x10xf32, #tpu.memory_space<vmem>>, %arg3: memref<256x32xf32, #tpu.memory_space<vmem>>, %arg4: memref<10x32xf32, #tpu.memory_space<vmem>>, %arg5: memref<1x32xf32, #tpu.memory_space<vmem>>, %arg6: memref<32x32xf32, #tpu.memory_space<vmem>>, %arg7: memref<1x32xf32, #tpu.memory_space<vmem>>, %arg8: memref<32x32xf32, #tpu.memory_space<vmem>>, %arg9: memref<1x32xf32, #tpu.memory_space<vmem>>, %arg10: memref<2x32xf32, #tpu.memory_space<vmem>>) attributes {dimension_semantics = [#tpu.dimension_semantics<parallel>], iteration_bounds = array<i64: 1>, scalar_prefetch = 0 : i64, scratch_operands = 0 : i64, tpu.core_type = #tpu.core_type<tc>, window_params = [{transform_indices = @transform_0, window_bounds = array<i64: 2, 256>}, {transform_indices = @transform_1, window_bounds = array<i64: 2, 10>}, {pipeline_mode = #tpu.pipeline_mode<synchronous>, transform_indices = @transform_2, window_bounds = array<i64: 256, 32>}, {pipeline_mode = #tpu.pipeline_mode<synchronous>, transform_indices = @transform_3, window_bounds = array<i64: 10, 32>}, {pipeline_mode = #tpu.pipeline_mode<synchronous>, transform_indices = @transform_4, window_bounds = array<i64: 1, 32>}, {pipeline_mode = #tpu.pipeline_mode<synchronous>, transform_indices = @transform_5, window_bounds = array<i64: 32, 32>}, {pipeline_mode = #tpu.pipeline_mode<synchronous>, transform_indices = @transform_6, window_bounds = array<i64: 1, 32>}, {pipeline_mode = #tpu.pipeline_mode<synchronous>, transform_indices = @transform_7, window_bounds = array<i64: 32, 32>}, {pipeline_mode = #tpu.pipeline_mode<synchronous>, transform_indices = @transform_8, window_bounds = array<i64: 1, 32>}, {transform_indices = @transform_9, window_bounds = array<i64: 2, 32>}]} {
    %c0 = arith.constant 0 : index
    %c0_0 = arith.constant 0 : index
    %0 = vector.load %arg1[%c0, %c0_0] : memref<2x256xf32, #tpu.memory_space<vmem>>, vector<2x256xf32>
    %c0_1 = arith.constant 0 : index
    %c0_2 = arith.constant 0 : index
    %1 = vector.load %arg2[%c0_1, %c0_2] : memref<2x10xf32, #tpu.memory_space<vmem>>, vector<2x10xf32>
    %c0_3 = arith.constant 0 : index
    %c0_4 = arith.constant 0 : index
    %2 = vector.load %arg3[%c0_3, %c0_4] : memref<256x32xf32, #tpu.memory_space<vmem>>, vector<256x32xf32>
    %cst = arith.constant dense<0.000000e+00> : vector<2x32xf32>
    %3 = tpu.matmul %0, %2, %cst {dimension_numbers = #tpu.dot_dimension_numbers<[1], [0], [0], [1], [0, 0, 1, 1], [], []>} : vector<2x256xf32>, vector<256x32xf32>, vector<2x32xf32> -> vector<2x32xf32>
    %c0_5 = arith.constant 0 : index
    %c0_6 = arith.constant 0 : index
    %4 = vector.load %arg4[%c0_5, %c0_6] : memref<10x32xf32, #tpu.memory_space<vmem>>, vector<10x32xf32>
    %cst_7 = arith.constant dense<0.000000e+00> : vector<2x32xf32>
    %5 = tpu.matmul %1, %4, %cst_7 {dimension_numbers = #tpu.dot_dimension_numbers<[1], [0], [0], [1], [0, 0, 1, 1], [], []>} : vector<2x10xf32>, vector<10x32xf32>, vector<2x32xf32> -> vector<2x32xf32>
    %6 = arith.addf %3, %5 : vector<2x32xf32>
    %c0_8 = arith.constant 0 : index
    %c0_9 = arith.constant 0 : index
    %7 = vector.load %arg5[%c0_8, %c0_9] : memref<1x32xf32, #tpu.memory_space<vmem>>, vector<1x32xf32>
    %8 = vector.broadcast %7 : vector<1x32xf32> to vector<2x32xf32>
    %9 = arith.addf %6, %8 : vector<2x32xf32>
    %cst_10 = arith.constant 0.000000e+00 : f32
    %10 = vector.broadcast %cst_10 : f32 to vector<2x32xf32>
    %11 = arith.subf %10, %9 : vector<2x32xf32>
    %12 = math.exp %11 : vector<2x32xf32>
    %cst_11 = arith.constant 1.000000e+00 : f32
    %13 = vector.broadcast %cst_11 : f32 to vector<2x32xf32>
    %14 = arith.addf %13, %12 : vector<2x32xf32>
    %15 = tpu.reciprocal %14 {approx = true} : vector<2x32xf32> -> vector<2x32xf32>
    %16 = arith.mulf %9, %15 : vector<2x32xf32>
    %c0_12 = arith.constant 0 : index
    %c0_13 = arith.constant 0 : index
    %17 = vector.load %arg6[%c0_12, %c0_13] : memref<32x32xf32, #tpu.memory_space<vmem>>, vector<32x32xf32>
    %cst_14 = arith.constant dense<0.000000e+00> : vector<2x32xf32>
    %18 = tpu.matmul %16, %17, %cst_14 {dimension_numbers = #tpu.dot_dimension_numbers<[1], [0], [0], [1], [0, 0, 1, 1], [], []>} : vector<2x32xf32>, vector<32x32xf32>, vector<2x32xf32> -> vector<2x32xf32>
    %c0_15 = arith.constant 0 : index
    %c0_16 = arith.constant 0 : index
    %19 = vector.load %arg7[%c0_15, %c0_16] : memref<1x32xf32, #tpu.memory_space<vmem>>, vector<1x32xf32>
    %20 = vector.broadcast %19 : vector<1x32xf32> to vector<2x32xf32>
    %21 = arith.addf %18, %20 : vector<2x32xf32>
    %cst_17 = arith.constant 0.000000e+00 : f32
    %22 = vector.broadcast %cst_17 : f32 to vector<2x32xf32>
    %23 = arith.subf %22, %21 : vector<2x32xf32>
    %24 = math.exp %23 : vector<2x32xf32>
    %cst_18 = arith.constant 1.000000e+00 : f32
    %25 = vector.broadcast %cst_18 : f32 to vector<2x32xf32>
    %26 = arith.addf %25, %24 : vector<2x32xf32>
    %27 = tpu.reciprocal %26 {approx = true} : vector<2x32xf32> -> vector<2x32xf32>
    %28 = arith.mulf %21, %27 : vector<2x32xf32>
    %c0_19 = arith.constant 0 : index
    %c0_20 = arith.constant 0 : index
    %29 = vector.load %arg8[%c0_19, %c0_20] : memref<32x32xf32, #tpu.memory_space<vmem>>, vector<32x32xf32>
    %cst_21 = arith.constant dense<0.000000e+00> : vector<2x32xf32>
    %30 = tpu.matmul %28, %29, %cst_21 {dimension_numbers = #tpu.dot_dimension_numbers<[1], [0], [0], [1], [0, 0, 1, 1], [], []>} : vector<2x32xf32>, vector<32x32xf32>, vector<2x32xf32> -> vector<2x32xf32>
    %c0_22 = arith.constant 0 : index
    %c0_23 = arith.constant 0 : index
    %31 = vector.load %arg9[%c0_22, %c0_23] : memref<1x32xf32, #tpu.memory_space<vmem>>, vector<1x32xf32>
    %32 = vector.broadcast %31 : vector<1x32xf32> to vector<2x32xf32>
    %33 = arith.addf %30, %32 : vector<2x32xf32>
    %34 = tpu.iota {dimensions = array<i32: 1>} : vector<2x32xi32>
    %c16_i32 = arith.constant 16 : i32
    %35 = vector.broadcast %c16_i32 : i32 to vector<2x32xi32>
    %36 = arith.cmpi slt, %34, %35 : vector<2x32xi32>
    %37 = math.exp %33 : vector<2x32xf32>
    %38 = arith.select %36, %33, %37 : vector<2x32xi1>, vector<2x32xf32>
    %c0_24 = arith.constant 0 : index
    %c0_25 = arith.constant 0 : index
    %39 = vector.load %arg10[%c0_24, %c0_25] : memref<2x32xf32, #tpu.memory_space<vmem>>, vector<2x32xf32>
    tpu.vector_store %arg10[%c0_24, %c0_25], %38 {strides = array<i32>} : memref<2x32xf32, #tpu.memory_space<vmem>>, vector<2x32xf32>,
    return
  }
  func.func @transform_0(%arg0: i32) -> (i32, i32) {
    %c0_i32 = arith.constant 0 : i32
    %c0_i32_0 = arith.constant 0 : i32
    return %arg0, %c0_i32 : i32, i32
  }
  func.func @transform_1(%arg0: i32) -> (i32, i32) {
    %c0_i32 = arith.constant 0 : i32
    %c0_i32_0 = arith.constant 0 : i32
    return %arg0, %c0_i32 : i32, i32
  }
  func.func @transform_2(%arg0: i32) -> (i32, i32) {
    %c0_i32 = arith.constant 0 : i32
    %c0_i32_0 = arith.constant 0 : i32
    %c0_i32_1 = arith.constant 0 : i32
    return %c0_i32, %c0_i32_0 : i32, i32
  }
  func.func @transform_3(%arg0: i32) -> (i32, i32) {
    %c0_i32 = arith.constant 0 : i32
    %c0_i32_0 = arith.constant 0 : i32
    %c0_i32_1 = arith.constant 0 : i32
    return %c0_i32, %c0_i32_0 : i32, i32
  }
  func.func @transform_4(%arg0: i32) -> (i32, i32) {
    %c0_i32 = arith.constant 0 : i32
    %c0_i32_0 = arith.constant 0 : i32
    %c0_i32_1 = arith.constant 0 : i32
    return %c0_i32, %c0_i32_0 : i32, i32
  }
  func.func @transform_5(%arg0: i32) -> (i32, i32) {
    %c0_i32 = arith.constant 0 : i32
    %c0_i32_0 = arith.constant 0 : i32
    %c0_i32_1 = arith.constant 0 : i32
    return %c0_i32, %c0_i32_0 : i32, i32
  }
  func.func @transform_6(%arg0: i32) -> (i32, i32) {
    %c0_i32 = arith.constant 0 : i32
    %c0_i32_0 = arith.constant 0 : i32
    %c0_i32_1 = arith.constant 0 : i32
    return %c0_i32, %c0_i32_0 : i32, i32
  }
  func.func @transform_7(%arg0: i32) -> (i32, i32) {
    %c0_i32 = arith.constant 0 : i32
    %c0_i32_0 = arith.constant 0 : i32
    %c0_i32_1 = arith.constant 0 : i32
    return %c0_i32, %c0_i32_0 : i32, i32
  }
  func.func @transform_8(%arg0: i32) -> (i32, i32) {
    %c0_i32 = arith.constant 0 : i32
    %c0_i32_0 = arith.constant 0 : i32
    %c0_i32_1 = arith.constant 0 : i32
    return %c0_i32, %c0_i32_0 : i32, i32
  }
  func.func @transform_9(%arg0: i32) -> (i32, i32) {
    %c0_i32 = arith.constant 0 : i32
    %c0_i32_0 = arith.constant 0 : i32
    return %arg0, %c0_i32 : i32, i32
  }
}

</mosaic_0001>

<llo_original>
// kernel: tpu_custom_call.1
$region0: #{tpu_custom_call.1}
  #allocation0 [shape = 'u32[]', space=smem, size = 0x4, offset = 0x4, fixed_abs, tag = 'smem constant byte address 0x4 - core index']
  #allocation1 [shape = 'u32[144,128]{1,0:T(1,128)}', space=vmem, size = 0x12000, scoped, tag = 'internal scratch']
  %s0 = inlined_call_operand.vmem [shape: f32[2,256], index: 0, kind: input, shape index: {}]
  %s1 = inlined_call_operand.vmem [shape: f32[2,10], index: 1, kind: input, shape index: {}]
  %s2 = inlined_call_operand.vmem [shape: f32[256,32], index: 2, kind: input, shape index: {}]
  %s3 = inlined_call_operand.vmem [shape: f32[10,32], index: 3, kind: input, shape index: {}]
  %s4 = inlined_call_operand.vmem [shape: f32[1,32], index: 4, kind: input, shape index: {}]
  %s5 = inlined_call_operand.vmem [shape: f32[32,32], index: 5, kind: input, shape index: {}]
  %s6 = inlined_call_operand.vmem [shape: f32[1,32], index: 6, kind: input, shape index: {}]
  %s7 = inlined_call_operand.vmem [shape: f32[32,32], index: 7, kind: input, shape index: {}]
  %s8 = inlined_call_operand.vmem [shape: f32[1,32], index: 8, kind: input, shape index: {}]
  %s9 = inlined_call_operand.hbm [shape: f32[2,32], index: 9, kind: output, shape index: {}]
  %s10 = sld [smem:[#allocation0]]
  $region46: #{tpu_custom_call.1} parent=0
    _
  %s12 = ssub.s32 1, %s10
  %s13 = scalar_select 0, %s12, %s10
  $region1: #{tpu_custom_call.1} parent=0
    #allocation2 [shape = 'u8[1024]{0}', space=vmem, size = 0x400, scoped, tag = 'output window, operand 0, single buffered']
    #allocation3 [shape = 's32[1]{0}', space=sflag, size = 0x4, scoped, tag = 'scoped memory for tpu_custom_call.1']
    %14 = vsyncpa [#allocation3], 0
    // Predicated region
    $region2: #{tpu_custom_call.1} parent=1 // pred_check
      _
    $region3: #{tpu_custom_call.1} parent=1 // pred_check_branch
      %16 = sbr.rel (0) target = $region5
    $region4: #{tpu_custom_call.1} parent=1 // pred_region
      _
    $region5: #{tpu_custom_call.1} parent=1 // pred_fallthru
      _
    // Predicated region
    $region6: #{tpu_custom_call.1} parent=1 // pred_check
      _
    $region7: #{tpu_custom_call.1} parent=1 // pred_check_branch
      %18 = sbr.rel (0) target = $region9
    $region8: #{tpu_custom_call.1} parent=1 // pred_region
      _
    $region9: #{tpu_custom_call.1} parent=1 // pred_fallthru
      _
    // Predicated region
    $region10: #{tpu_custom_call.1} parent=1 // pred_check
      _
    $region11: #{tpu_custom_call.1} parent=1 // pred_check_branch
      %20 = sbr.rel (0) target = $region13
    $region12: #{tpu_custom_call.1} parent=1 // pred_region
      _
    $region13: #{tpu_custom_call.1} parent=1 // pred_fallthru
      _
    // Predicated region
    $region14: #{tpu_custom_call.1} parent=1 // pred_check
      _
    $region15: #{tpu_custom_call.1} parent=1 // pred_check_branch
      %22 = sbr.rel (0) target = $region17
    $region16: #{tpu_custom_call.1} parent=1 // pred_region
      _
    $region17: #{tpu_custom_call.1} parent=1 // pred_fallthru
      _
    // Predicated region
    $region18: #{tpu_custom_call.1} parent=1 // pred_check
      _
    $region19: #{tpu_custom_call.1} parent=1 // pred_check_branch
      %24 = sbr.rel (0) target = $region21
    $region20: #{tpu_custom_call.1} parent=1 // pred_region
      _
    $region21: #{tpu_custom_call.1} parent=1 // pred_fallthru
      _
    // Predicated region
    $region22: #{tpu_custom_call.1} parent=1 // pred_check
      _
    $region23: #{tpu_custom_call.1} parent=1 // pred_check_branch
      %26 = sbr.rel (0) target = $region25
    $region24: #{tpu_custom_call.1} parent=1 // pred_region
      _
    $region25: #{tpu_custom_call.1} parent=1 // pred_fallthru
      _
    // Predicated region
    $region26: #{tpu_custom_call.1} parent=1 // pred_check
      _
    $region27: #{tpu_custom_call.1} parent=1 // pred_check_branch
      %28 = sbr.rel (0) target = $region29
    $region28: #{tpu_custom_call.1} parent=1 // pred_region
      _
    $region29: #{tpu_custom_call.1} parent=1 // pred_fallthru
      _
    // Predicated region
    $region30: #{tpu_custom_call.1} parent=1 // pred_check
      _
    $region31: #{tpu_custom_call.1} parent=1 // pred_check_branch
      %30 = sbr.rel (0) target = $region33
    $region32: #{tpu_custom_call.1} parent=1 // pred_region
      _
    $region33: #{tpu_custom_call.1} parent=1 // pred_fallthru
      _
    // Predicated region
    $region34: #{tpu_custom_call.1} parent=1 // pred_check
      _
    $region35: #{tpu_custom_call.1} parent=1 // pred_check_branch
      %32 = sbr.rel (0) target = $region37
    $region36: #{tpu_custom_call.1} parent=1 // pred_region
      _
    $region37: #{tpu_custom_call.1} parent=1 // pred_fallthru
      _
    %v33 = vld [vmem:[%s0] sm:$0xf]
    %v34 = vld [vmem:[%s1] sm:$0x3]
    %v35 = vld [vmem:[%s2] sm:$0xff]
    %v36 = vld [vmem:[%s2 + $0x8] sm:$0xff]
    %v37 = vld [vmem:[%s2 + $0x10] sm:$0xff]
    %v38 = vld [vmem:[%s2 + $0x18] sm:$0xff]
    %v39 = vld [vmem:[%s2 + $0x20] sm:$0xff]
    %v40 = vld [vmem:[%s2 + $0x28] sm:$0xff]
    %v41 = vld [vmem:[%s2 + $0x30] sm:$0xff]
    %v42 = vld [vmem:[%s2 + $0x38] sm:$0xff]
    %v43 = vld [vmem:[%s2 + $0x40] sm:$0xff]
    %v44 = vld [vmem:[%s2 + $0x48] sm:$0xff]
    %v45 = vld [vmem:[%s2 + $0x50] sm:$0xff]
    %v46 = vld [vmem:[%s2 + $0x58] sm:$0xff]
    %v47 = vld [vmem:[%s2 + $0x60] sm:$0xff]
    %v48 = vld [vmem:[%s2 + $0x68] sm:$0xff]
    %v49 = vld [vmem:[%s2 + $0x70] sm:$0xff]
    %v50 = vld [vmem:[%s2 + $0x78] sm:$0xff]
    %v51 = vld [vmem:[%s2 + $0x80] sm:$0xff]
    %v52 = vld [vmem:[%s2 + $0x88] sm:$0xff]
    %v53 = vld [vmem:[%s2 + $0x90] sm:$0xff]
    %v54 = vld [vmem:[%s2 + $0x98] sm:$0xff]
    %v55 = vld [vmem:[%s2 + $0xa0] sm:$0xff]
    %v56 = vld [vmem:[%s2 + $0xa8] sm:$0xff]
    %v57 = vld [vmem:[%s2 + $0xb0] sm:$0xff]
    %v58 = vld [vmem:[%s2 + $0xb8] sm:$0xff]
    %v59 = vld [vmem:[%s2 + $0xc0] sm:$0xff]
    %v60 = vld [vmem:[%s2 + $0xc8] sm:$0xff]
    %v61 = vld [vmem:[%s2 + $0xd0] sm:$0xff]
    %v62 = vld [vmem:[%s2 + $0xd8] sm:$0xff]
    %v63 = vld [vmem:[%s2 + $0xe0] sm:$0xff]
    %v64 = vld [vmem:[%s2 + $0xe8] sm:$0xff]
    %v65 = vld [vmem:[%s2 + $0xf0] sm:$0xff]
    %v66 = vld [vmem:[%s2 + $0xf8] sm:$0xff]
    %v67 = vld [vmem:[%s3] sm:$0xff]
    %v68 = vld [vmem:[%s3 + $0x8] sm:$0x3]
    %vm69 = vcmask 80896
    %v71 = vsel %vm69, %v34, 0
    %vm73 = vcmask 1041408
    %v75 = vsel %vm73, %v68, 0
    %77 = vmatprep.subr.mxu0 0.0
    %78 = vmatpush1.msra.mxu0 %v67
    %79 = vmatprep.subr.mxu0 0.0
    %80 = vmatpush1.msra.mxu0 %v75
    %81 = vmatprep.subr.mxu0 0.0
    %82 = vmatpush1.msra.mxu0 0.0
    %83 = vmatprep.subr.mxu0 0.0
    %84 = vmatpush1.msra.mxu0 0.0
    %85 = vmatprep.subr.mxu0 0.0
    %86 = vmatpush1.msra.mxu0 0.0
    %87 = vmatprep.subr.mxu0 0.0
    %88 = vmatpush1.msra.mxu0 0.0
    %89 = vmatprep.subr.mxu0 0.0
    %90 = vmatpush1.msra.mxu0 0.0
    %91 = vmatprep.subr.mxu0 0.0
    %92 = vmatpush1.msra.mxu0 0.0
    %93 = vmatprep.subr.mxu0 0.0
    %94 = vmatpush1.msra.mxu0 0.0
    %95 = vmatprep.subr.mxu0 0.0
    %96 = vmatpush1.msra.mxu0 0.0
    %97 = vmatprep.subr.mxu0 0.0
    %98 = vmatpush1.msra.mxu0 0.0
    %99 = vmatprep.subr.mxu0 0.0
    %100 = vmatpush1.msra.mxu0 0.0
    %101 = vmatprep.subr.mxu0 0.0
    %102 = vmatpush1.msra.mxu0 0.0
    %103 = vmatprep.subr.mxu0 0.0
    %104 = vmatpush1.msra.mxu0 0.0
    %105 = vmatprep.subr.mxu0 0.0
    %106 = vmatpush1.msra.mxu0 0.0
    %107 = vmatprep.subr.mxu0 0.0
    %108 = vmatpush1.msra.mxu0 0.0
    %109 = vmatprep.subr.mxu0 0.0
    %110 = vmatpush1.msra.mxu0 0.0
    %111 = vmatprep.subr.mxu0 0.0
    %112 = vmatpush1.msra.mxu0 0.0
    %113 = vmatprep.subr.mxu0 0.0
    %114 = vmatpush1.msra.mxu0 0.0
    %115 = vmatprep.subr.mxu0 0.0
    %116 = vmatpush1.msra.mxu0 0.0
    %117 = vmatprep.subr.mxu0 0.0
    %118 = vmatpush1.msra.mxu0 0.0
    %119 = vmatprep.subr.mxu0 0.0
    %120 = vmatpush1.msra.mxu0 0.0
    %121 = vmatprep.subr.mxu0 0.0
    %122 = vmatpush1.msra.mxu0 0.0
    %123 = vmatprep.subr.mxu0 0.0
    %124 = vmatpush1.msra.mxu0 0.0
    %125 = vmatprep.subr.mxu0 0.0
    %126 = vmatpush1.msra.mxu0 0.0
    %127 = vmatprep.subr.mxu0 0.0
    %128 = vmatpush1.msra.mxu0 0.0
    %129 = vmatprep.subr.mxu0 0.0
    %130 = vmatpush1.msra.mxu0 0.0
    %131 = vmatprep.subr.mxu0 0.0
    %132 = vmatpush1.msra.mxu0 0.0
    %133 = vmatprep.subr.mxu0 0.0
    %134 = vmatpush1.msra.mxu0 0.0
    %135 = vmatprep.subr.mxu0 0.0
    %136 = vmatpush1.msra.mxu0 0.0
    %137 = vmatprep.subr.mxu0 0.0
    %138 = vmatpush1.msra.mxu0 0.0
    %139 = vmatprep.subr.mxu0 0.0
    %140 = vmatpush1.msra.mxu0 0.0
    %141 = vmatprep.mubr.f32.mxu0 0.0
    %142 = vmatmul.mubr.f32.gmra.mrb[0].mxu0 %v71
    %v143 = vpop.f32.mrb[0].mxu0
    %v144 = vadd.f32 0.0, %v143
    %v145 = vpop.f32.mrb[0].mxu0
    %146 = vdwg.mxu0
    %v149 = vunpack.c.l.s4 1983009808
    %v150 = vunpack.c.0.s8 %v149
    %v151 = vlaneseq
    %v152 = vshrl.u32 %v151, 7
    %v153 = vsub.s32 %v150, %v152
    %v154 = vrot.slane %v33, %v153
    %v155 = vcombine.high %v154, %v154
    %158 = vmatprep.subr.mxu0 0.0
    %159 = vmatpush1.msra.mxu0 %v35
    %160 = vmatprep.subr.mxu0 0.0
    %161 = vmatpush1.msra.mxu0 %v36
    %162 = vmatprep.subr.mxu0 0.0
    %163 = vmatpush1.msra.mxu0 %v37
    %164 = vmatprep.subr.mxu0 0.0
    %165 = vmatpush1.msra.mxu0 %v38
    %166 = vmatprep.subr.mxu0 0.0
    %167 = vmatpush1.msra.mxu0 %v39
    %168 = vmatprep.subr.mxu0 0.0
    %169 = vmatpush1.msra.mxu0 %v40
    %170 = vmatprep.subr.mxu0 0.0
    %171 = vmatpush1.msra.mxu0 %v41
    %172 = vmatprep.subr.mxu0 0.0
    %173 = vmatpush1.msra.mxu0 %v42
    %174 = vmatprep.subr.mxu0 0.0
    %175 = vmatpush1.msra.mxu0 %v43
    %176 = vmatprep.subr.mxu0 0.0
    %177 = vmatpush1.msra.mxu0 %v44
    %178 = vmatprep.subr.mxu0 0.0
    %179 = vmatpush1.msra.mxu0 %v45
    %180 = vmatprep.subr.mxu0 0.0
    %181 = vmatpush1.msra.mxu0 %v46
    %182 = vmatprep.subr.mxu0 0.0
    %183 = vmatpush1.msra.mxu0 %v47
    %184 = vmatprep.subr.mxu0 0.0
    %185 = vmatpush1.msra.mxu0 %v48
    %186 = vmatprep.subr.mxu0 0.0
    %187 = vmatpush1.msra.mxu0 %v49
    %188 = vmatprep.subr.mxu0 0.0
    %189 = vmatpush1.msra.mxu0 %v50
    %190 = vmatprep.subr.mxu0 0.0
    %191 = vmatpush1.msra.mxu0 %v51
    %192 = vmatprep.subr.mxu0 0.0
    %193 = vmatpush1.msra.mxu0 %v52
    %194 = vmatprep.subr.mxu0 0.0
    %195 = vmatpush1.msra.mxu0 %v53
    %196 = vmatprep.subr.mxu0 0.0
    %197 = vmatpush1.msra.mxu0 %v54
    %198 = vmatprep.subr.mxu0 0.0
    %199 = vmatpush1.msra.mxu0 %v55
    %200 = vmatprep.subr.mxu0 0.0
    %201 = vmatpush1.msra.mxu0 %v56
    %202 = vmatprep.subr.mxu0 0.0
    %203 = vmatpush1.msra.mxu0 %v57
    %204 = vmatprep.subr.mxu0 0.0
    %205 = vmatpush1.msra.mxu0 %v58
    %206 = vmatprep.subr.mxu0 0.0
    %207 = vmatpush1.msra.mxu0 %v59
    %208 = vmatprep.subr.mxu0 0.0
    %209 = vmatpush1.msra.mxu0 %v60
    %210 = vmatprep.subr.mxu0 0.0
    %211 = vmatpush1.msra.mxu0 %v61
    %212 = vmatprep.subr.mxu0 0.0
    %213 = vmatpush1.msra.mxu0 %v62
    %214 = vmatprep.subr.mxu0 0.0
    %215 = vmatpush1.msra.mxu0 %v63
    %216 = vmatprep.subr.mxu0 0.0
    %217 = vmatpush1.msra.mxu0 %v64
    %218 = vmatprep.subr.mxu0 0.0
    %219 = vmatpush1.msra.mxu0 %v65
    %220 = vmatprep.subr.mxu0 0.0
    %221 = vmatpush1.msra.mxu0 %v66
    %222 = vmatprep.mubr.f32.mxu0 %v155
    %223 = vmatmul.mubr.f32.gmra.mrb[0].mxu0 %v154
    %v224 = vpop.f32.mrb[0].mxu0
    %v225 = vadd.f32 %v144, %v224
    %v226 = vpop.f32.mrb[0].mxu0
    %227 = vdwg.mxu0
    %v228 = vld [vmem:[%s4] sm:$0x1]
    %v230 = vlaneseq
    %v231 = vshrl.u32 %v230, 7
    %v232 = vsub.s32 0, %v231
    %v233 = vrot.slane %v228, %v232
    %v235 = vadd.f32 %v225, %v233
    %v236 = vsub.f32 0.0, %v235
    %v237 = vmul.f32 %v236, 1.442695
    %v238 = vpow.pop %v237
    %v239 = vadd.f32 %v238, 1.0
    %v240 = vrcp.pop %v239
    %v241 = vmul.f32 %v235, %v240
    %v242 = vld [vmem:[%s5] sm:$0xff]
    %v243 = vld [vmem:[%s5 + $0x8] sm:$0xff]
    %v244 = vld [vmem:[%s5 + $0x10] sm:$0xff]
    %v245 = vld [vmem:[%s5 + $0x18] sm:$0xff]
    %v246 = vld [vmem:[%s6] sm:$0x1]
    %v248 = vlaneseq
    %v249 = vshrl.u32 %v248, 7
    %v250 = vsub.s32 0, %v249
    %v251 = vrot.slane %v246, %v250
    %vm253 = vcmask 261120
    %v255 = vsel %vm253, %v241, 0
    %257 = vmatprep.subr.mxu0 0.0
    %258 = vmatpush1.msra.mxu0 %v242
    %259 = vmatprep.subr.mxu0 0.0
    %260 = vmatpush1.msra.mxu0 %v243
    %261 = vmatprep.subr.mxu0 0.0
    %262 = vmatpush1.msra.mxu0 %v244
    %263 = vmatprep.subr.mxu0 0.0
    %264 = vmatpush1.msra.mxu0 %v245
    %265 = vmatprep.subr.mxu0 0.0
    %266 = vmatpush1.msra.mxu0 0.0
    %267 = vmatprep.subr.mxu0 0.0
    %268 = vmatpush1.msra.mxu0 0.0
    %269 = vmatprep.subr.mxu0 0.0
    %270 = vmatpush1.msra.mxu0 0.0
    %271 = vmatprep.subr.mxu0 0.0
    %272 = vmatpush1.msra.mxu0 0.0
    %273 = vmatprep.subr.mxu0 0.0
    %274 = vmatpush1.msra.mxu0 0.0
    %275 = vmatprep.subr.mxu0 0.0
    %276 = vmatpush1.msra.mxu0 0.0
    %277 = vmatprep.subr.mxu0 0.0
    %278 = vmatpush1.msra.mxu0 0.0
    %279 = vmatprep.subr.mxu0 0.0
    %280 = vmatpush1.msra.mxu0 0.0
    %281 = vmatprep.subr.mxu0 0.0
    %282 = vmatpush1.msra.mxu0 0.0
    %283 = vmatprep.subr.mxu0 0.0
    %284 = vmatpush1.msra.mxu0 0.0
    %285 = vmatprep.subr.mxu0 0.0
    %286 = vmatpush1.msra.mxu0 0.0
    %287 = vmatprep.subr.mxu0 0.0
    %288 = vmatpush1.msra.mxu0 0.0
    %289 = vmatprep.subr.mxu0 0.0
    %290 = vmatpush1.msra.mxu0 0.0
    %291 = vmatprep.subr.mxu0 0.0
    %292 = vmatpush1.msra.mxu0 0.0
    %293 = vmatprep.subr.mxu0 0.0
    %294 = vmatpush1.msra.mxu0 0.0
    %295 = vmatprep.subr.mxu0 0.0
    %296 = vmatpush1.msra.mxu0 0.0
    %297 = vmatprep.subr.mxu0 0.0
    %298 = vmatpush1.msra.mxu0 0.0
    %299 = vmatprep.subr.mxu0 0.0
    %300 = vmatpush1.msra.mxu0 0.0
    %301 = vmatprep.subr.mxu0 0.0
    %302 = vmatpush1.msra.mxu0 0.0
    %303 = vmatprep.subr.mxu0 0.0
    %304 = vmatpush1.msra.mxu0 0.0
    %305 = vmatprep.subr.mxu0 0.0
    %306 = vmatpush1.msra.mxu0 0.0
    %307 = vmatprep.subr.mxu0 0.0
    %308 = vmatpush1.msra.mxu0 0.0
    %309 = vmatprep.subr.mxu0 0.0
    %310 = vmatpush1.msra.mxu0 0.0
    %311 = vmatprep.subr.mxu0 0.0
    %312 = vmatpush1.msra.mxu0 0.0
    %313 = vmatprep.subr.mxu0 0.0
    %314 = vmatpush1.msra.mxu0 0.0
    %315 = vmatprep.subr.mxu0 0.0
    %316 = vmatpush1.msra.mxu0 0.0
    %317 = vmatprep.subr.mxu0 0.0
    %318 = vmatpush1.msra.mxu0 0.0
    %319 = vmatprep.subr.mxu0 0.0
    %320 = vmatpush1.msra.mxu0 0.0
    %321 = vmatprep.mubr.f32.mxu0 0.0
    %322 = vmatmul.mubr.f32.gmra.mrb[0].mxu0 %v255
    %v323 = vpop.f32.mrb[0].mxu0
    %v324 = vadd.f32 %v251, %v323
    %v325 = vpop.f32.mrb[0].mxu0
    %326 = vdwg.mxu0
    %v327 = vsub.f32 0.0, %v324
    %v328 = vmul.f32 %v327, 1.442695
    %v329 = vpow.pop %v328
    %v330 = vadd.f32 %v329, 1.0
    %v331 = vrcp.pop %v330
    %v332 = vmul.f32 %v324, %v331
    %v333 = vld [vmem:[%s7] sm:$0xff]
    %v334 = vld [vmem:[%s7 + $0x8] sm:$0xff]
    %v335 = vld [vmem:[%s7 + $0x10] sm:$0xff]
    %v336 = vld [vmem:[%s7 + $0x18] sm:$0xff]
    %v337 = vld [vmem:[%s8] sm:$0x1]
    %v339 = vlaneseq
    %v340 = vshrl.u32 %v339, 7
    %v341 = vsub.s32 0, %v340
    %v342 = vrot.slane %v337, %v341
    %v345 = vsel %vm253, %v332, 0
    %347 = vmatprep.subr.mxu0 0.0
    %348 = vmatpush1.msra.mxu0 %v333
    %349 = vmatprep.subr.mxu0 0.0
    %350 = vmatpush1.msra.mxu0 %v334
    %351 = vmatprep.subr.mxu0 0.0
    %352 = vmatpush1.msra.mxu0 %v335
    %353 = vmatprep.subr.mxu0 0.0
    %354 = vmatpush1.msra.mxu0 %v336
    %355 = vmatprep.subr.mxu0 0.0
    %356 = vmatpush1.msra.mxu0 0.0
    %357 = vmatprep.subr.mxu0 0.0
    %358 = vmatpush1.msra.mxu0 0.0
    %359 = vmatprep.subr.mxu0 0.0
    %360 = vmatpush1.msra.mxu0 0.0
    %361 = vmatprep.subr.mxu0 0.0
    %362 = vmatpush1.msra.mxu0 0.0
    %363 = vmatprep.subr.mxu0 0.0
    %364 = vmatpush1.msra.mxu0 0.0
    %365 = vmatprep.subr.mxu0 0.0
    %366 = vmatpush1.msra.mxu0 0.0
    %367 = vmatprep.subr.mxu0 0.0
    %368 = vmatpush1.msra.mxu0 0.0
    %369 = vmatprep.subr.mxu0 0.0
    %370 = vmatpush1.msra.mxu0 0.0
    %371 = vmatprep.subr.mxu0 0.0
    %372 = vmatpush1.msra.mxu0 0.0
    %373 = vmatprep.subr.mxu0 0.0
    %374 = vmatpush1.msra.mxu0 0.0
    %375 = vmatprep.subr.mxu0 0.0
    %376 = vmatpush1.msra.mxu0 0.0
    %377 = vmatprep.subr.mxu0 0.0
    %378 = vmatpush1.msra.mxu0 0.0
    %379 = vmatprep.subr.mxu0 0.0
    %380 = vmatpush1.msra.mxu0 0.0
    %381 = vmatprep.subr.mxu0 0.0
    %382 = vmatpush1.msra.mxu0 0.0
    %383 = vmatprep.subr.mxu0 0.0
    %384 = vmatpush1.msra.mxu0 0.0
    %385 = vmatprep.subr.mxu0 0.0
    %386 = vmatpush1.msra.mxu0 0.0
    %387 = vmatprep.subr.mxu0 0.0
    %388 = vmatpush1.msra.mxu0 0.0
    %389 = vmatprep.subr.mxu0 0.0
    %390 = vmatpush1.msra.mxu0 0.0
    %391 = vmatprep.subr.mxu0 0.0
    %392 = vmatpush1.msra.mxu0 0.0
    %393 = vmatprep.subr.mxu0 0.0
    %394 = vmatpush1.msra.mxu0 0.0
    %395 = vmatprep.subr.mxu0 0.0
    %396 = vmatpush1.msra.mxu0 0.0
    %397 = vmatprep.subr.mxu0 0.0
    %398 = vmatpush1.msra.mxu0 0.0
    %399 = vmatprep.subr.mxu0 0.0
    %400 = vmatpush1.msra.mxu0 0.0
    %401 = vmatprep.subr.mxu0 0.0
    %402 = vmatpush1.msra.mxu0 0.0
    %403 = vmatprep.subr.mxu0 0.0
    %404 = vmatpush1.msra.mxu0 0.0
    %405 = vmatprep.subr.mxu0 0.0
    %406 = vmatpush1.msra.mxu0 0.0
    %407 = vmatprep.subr.mxu0 0.0
    %408 = vmatpush1.msra.mxu0 0.0
    %409 = vmatprep.subr.mxu0 0.0
    %410 = vmatpush1.msra.mxu0 0.0
    %411 = vmatprep.mubr.f32.mxu0 0.0
    %412 = vmatmul.mubr.f32.gmra.mrb[0].mxu0 %v345
    %v413 = vpop.f32.mrb[0].mxu0
    %v414 = vadd.f32 %v342, %v413
    %v415 = vpop.f32.mrb[0].mxu0
    %416 = vdwg.mxu0
    %v417 = vlaneseq
    %v418 = vand.u32 %v417, 127
    %vm419 = vcmp.lt.s32.totalorder %v418, 16
    %v420 = vmul.f32 %v414, 1.442695
    %v421 = vpow.pop %v420
    %v422 = vsel %vm419, %v414, %v421
    %vm423 = vcmask 254976
    %424 = vst.msk [vmem:[#allocation2] sm:$0x3] %vm423, %v422
    // Predicated region
    $region38: #{tpu_custom_call.1} parent=1 // pred_check
      _
    $region39: #{tpu_custom_call.1} parent=1 // pred_check_branch
      %426 = sbr.rel (0) target = $region41
    $region40: #{tpu_custom_call.1} parent=1 // pred_region
      %s428 = ssub.s32 32, 32
      %429 = vsyncadd [#allocation3], %s428
      %s431 = sshll.u32 [#allocation2], 4
      %s432 = int_to_ptr.vmem [resolvable:$true] %s431
      %434 = dma.vmem_to_hbm [thread:$0]  %s432, 32, %s9, [#allocation3]
    $region41: #{tpu_custom_call.1} parent=1 // pred_fallthru
      _
    // Predicated region
    $region42: #{tpu_custom_call.1} parent=1 // pred_check
      _
    $region43: #{tpu_custom_call.1} parent=1 // pred_check_branch
      %436 = sbr.rel (0) target = $region45
    $region44: #{tpu_custom_call.1} parent=1 // pred_region
      %437 = dma.done [#allocation3], 32
    $region45: #{tpu_custom_call.1} parent=1 // pred_fallthru
      _
    %438 = vsyncpa [#allocation3], 1

</llo_original>
